<compile_context>
chip_gen: v5e
topology: v5e:2x2
jax: 0.10.0
libtpu: 0.0.40
codegen_flags: <defaults>
</compile_context>

<pallas_src>
import jax
import jax.numpy as jnp
from jax import lax
from jax.experimental import pallas as pl
from jax.experimental.pallas import tpu as pltpu

EPS = 1e-5

# Sublane packing unit per element size (f32 -> 8, bf16 -> 16, int8/fp8 -> 32).
_SUBLANE_UNIT = {4: 8, 2: 16, 1: 32}
# Cap pass-1 row tile so the two (row_tile, 128) f32 chunk accumulators plus a
# loaded chunk stay within the 64-vreg register file (3 * 16 vregs at 128 rows).
_PASS1_MAX_ROWS = 128


def _round_up(v, m):
    return ((v + m - 1) // m) * m


def _device_tuning():
    """Best-effort per-chip tile defaults; safe fallback if detection fails."""
    max_row, max_lane, n_tc = 256, 2048, 1
    try:
        kind = jax.devices()[0].device_kind.lower()
    except Exception:
        return max_row, max_lane, n_tc
    if "v6" in kind:
        # 32 MiB scoped-VMEM default / 128 MiB physical: larger lane tiles halve
        # grid steps; pass-2 footprint stays ~16-18 MiB.
        max_lane = 4096
    if ("v4" in kind) or ("v5p" in kind) or ("v7" in kind) or ("7x" in kind):
        n_tc = 2  # dual-TensorCore chips: keep pass-1's parallel row axis >= 2 blocks
    return max_row, max_lane, n_tc


def _make_reduce_kernel(row_tile, lane_tile, hw, num_l):
    """Build the per-row [sum, sum_sq] reduction kernel for the given tiling."""
    if num_l == 1:
        # Single lane block per row block: one cross-lane reduce, write stats once.
        def kernel(x_ref, stat_ref):
            x = x_ref[...].astype(jnp.float32)
            stat_ref[:, 0:1] = jnp.sum(x, axis=1, keepdims=True)
            stat_ref[:, 1:2] = jnp.sum(x * x, axis=1, keepdims=True)

        return kernel, []

    tail = hw % lane_tile  # static; lane_tile is a multiple of 128 in this branch

    def kernel(x_ref, stat_ref, s_acc, q_acc):
        l = pl.program_id(1)
        nl = pl.num_programs(1)

        @pl.when(l == 0)
        def _():
            s_acc[...] = jnp.zeros_like(s_acc)
            q_acc[...] = jnp.zeros_like(q_acc)

        def accumulate(valid):
            # `valid` is a static lane count (1..lane_tile) for this block.
            # Pure VPU adds over 128-wide lane chunks; no XLU in the steady state.
            s_blk = jnp.zeros((row_tile, 128), jnp.float32)
            q_blk = jnp.zeros((row_tile, 128), jnp.float32)
            for j in range((valid + 127) // 128):
                xj = x_ref[:, j * 128:(j + 1) * 128].astype(jnp.float32)
                v = valid - j * 128
                if v < 128:  # static tail chunk: zero out padded (OOB) lanes
                    lane = lax.broadcasted_iota(jnp.int32, xj.shape, 1)
                    xj = jnp.where(lane < v, xj, 0.0)
                s_blk = s_blk + xj
                q_blk = q_blk + xj * xj
            s_acc[...] += s_blk
            q_acc[...] += q_blk

        if tail == 0:
            accumulate(lane_tile)
        else:
            @pl.when(l < nl - 1)
            def _():
                accumulate(lane_tile)

            @pl.when(l == nl - 1)
            def _():
                accumulate(tail)

        # One cross-lane (XLU) reduce + narrow stat store per row block.
        @pl.when(l == nl - 1)
        def _():
            stat_ref[:, 0:1] = jnp.sum(s_acc[...], axis=1, keepdims=True)
            stat_ref[:, 1:2] = jnp.sum(q_acc[...], axis=1, keepdims=True)

    scratch = [pltpu.VMEM((row_tile, 128), jnp.float32),
               pltpu.VMEM((row_tile, 128), jnp.float32)]
    return kernel, scratch


def _apply_kernel(x_ref, p_ref, o_ref):
    """y = x*scale + bias (folded BN affine), then per-channel PReLU."""
    x = x_ref[...].astype(jnp.float32)
    scale = p_ref[:, 0:1]
    bias = p_ref[:, 1:2]
    alpha = p_ref[:, 2:3]
    y = x * scale + bias
    o_ref[...] = jnp.where(y >= 0.0, y, alpha * y).astype(o_ref.dtype)


def bn_prelu(x_nchw, gamma, beta, alpha, *, eps=EPS,
             max_row_tile=None, max_lane_tile=None):
    """x_nchw: (N, C, H, W). gamma/beta/alpha: (C,). Returns (N, C, H, W)."""
    N, C, H, W = x_nchw.shape
    hw = H * W
    rows = N * C

    dev_row, dev_lane, n_tc = _device_tuning()
    if max_row_tile is None:
        max_row_tile = dev_row
    if max_lane_tile is None:
        max_lane_tile = dev_lane

    unit = _SUBLANE_UNIT.get(x_nchw.dtype.itemsize, 8)

    # --- lane tiling (shared by both passes); VMEM always bounded -----------
    if hw <= max_lane_tile:
        lane_tile, num_l = hw, 1                     # full extent, no tail
    else:
        lane_tile = max(128, (max_lane_tile // 128) * 128)
        num_l = pl.cdiv(hw, lane_tile)               # tail masked in the kernel

    # --- row tiling ----------------------------------------------------------
    # Pass 1: cap for register-resident chunk accumulators; ensure >= 2 blocks
    # on the 'parallel' row axis for dual-TensorCore chips.
    row_tile1 = rows if rows <= _PASS1_MAX_ROWS else _PASS1_MAX_ROWS
    if n_tc >= 2 and rows >= 2 * unit:
        row_tile1 = min(row_tile1, _round_up(-(-rows // 2), unit))
    # Pass 2: just bound the block size; row/lane tails handled by Pallas masking.
    row_tile2 = rows if rows <= max_row_tile else max_row_tile

    num_r1 = pl.cdiv(rows, row_tile1)
    num_r2 = pl.cdiv(rows, row_tile2)

    # Free, contiguous reshape (no HBM permute): row index = n*C + c.
    x2 = x_nchw.reshape(rows, hw)

    # ---- Pass 1: per-row [sum, sum_sq] --------------------------------------
    reduce_kernel, scratch = _make_reduce_kernel(row_tile1, lane_tile, hw, num_l)
    stats = pl.pallas_call(
        reduce_kernel,
        grid=(num_r1, num_l),                         # reduction (lane) axis last
        in_specs=[pl.BlockSpec((row_tile1, lane_tile), lambda r, l: (r, l))],
        out_specs=pl.BlockSpec((row_tile1, 2), lambda r, l: (r, 0)),  # resident
        out_shape=jax.ShapeDtypeStruct((rows, 2), jnp.float32),
        scratch_shapes=scratch,
        compiler_params=pltpu.CompilerParams(
            dimension_semantics=("parallel", "arbitrary")),
    )(x2)

    # ---- Tiny per-channel finalize (plain JAX, O(N*C) work) -----------------
    count = float(N * hw)
    per_nc = stats.reshape(N, C, 2)
    sum_c = jnp.sum(per_nc[..., 0], axis=0)
    sq_c = jnp.sum(per_nc[..., 1], axis=0)
    mean = sum_c / count
    # E[x^2] - E[x]^2 can go slightly negative from f32 cancellation: clamp.
    var = jnp.maximum(sq_c / count - mean * mean, 0.0)
    inv_std = lax.rsqrt(var + eps)
    scale_c = gamma.astype(jnp.float32) * inv_std     # fold BN affine into one FMA
    bias_c = beta.astype(jnp.float32) - mean * scale_c
    # Single packed per-row parameter stream: [scale, bias, alpha] per (n, c) row.
    params_c = jnp.stack([scale_c, bias_c, alpha.astype(jnp.float32)], axis=1)
    params = jnp.tile(params_c, (N, 1))               # (rows, 3)

    # ---- Pass 2: apply folded affine + PReLU ---------------------------------
    out2 = pl.pallas_call(
        _apply_kernel,
        grid=(num_r2, num_l),
        in_specs=[pl.BlockSpec((row_tile2, lane_tile), lambda r, l: (r, l)),
                  pl.BlockSpec((row_tile2, 3), lambda r, l: (r, 0))],
        out_specs=pl.BlockSpec((row_tile2, lane_tile), lambda r, l: (r, l)),
        out_shape=jax.ShapeDtypeStruct((rows, hw), x_nchw.dtype),
        compiler_params=pltpu.CompilerParams(
            dimension_semantics=("parallel", "parallel")),
    )(x2, params)

    return out2.reshape(N, C, H, W)


def bn_prelu_reference(x_nchw, gamma, beta, alpha, eps=EPS):
    """Pure-JAX reference matching PyTorch BatchNorm2d(train) + PReLU."""
    mean = jnp.mean(x_nchw, axis=(0, 2, 3), keepdims=True)
    var = jnp.mean((x_nchw - mean) ** 2, axis=(0, 2, 3), keepdims=True)
    y = (x_nchw - mean) / jnp.sqrt(var + eps)
    y = y * gamma.reshape(1, -1, 1, 1) + beta.reshape(1, -1, 1, 1)
    a = alpha.reshape(1, -1, 1, 1)
    return jnp.where(y >= 0.0, y, a * y)


if __name__ == "__main__":
    key = jax.random.PRNGKey(0)
    kx, kg, kb, kx2 = jax.random.split(key, 4)

    # PyTorch-style defaults with a small perturbation so affine/PReLU paths
    # are actually exercised.
    N, C, H, W = 2, 4, 16, 16
    gamma = 1.0 + 0.1 * jax.random.normal(kg, (C,), dtype=jnp.float32)
    beta = 0.1 * jax.random.normal(kb, (C,), dtype=jnp.float32)
    alpha = jnp.full((C,), 0.25, dtype=jnp.float32)   # nn.PReLU default init

    # Check 1: small canonical shape (single lane block per row block).
    x = jax.random.normal(kx, (N, C, H, W), dtype=jnp.float32)
    out = jax.block_until_ready(bn_prelu(x, gamma, beta, alpha))
    ref = bn_prelu_reference(x, gamma, beta, alpha)
    assert out.shape == (N, C, H, W)
    assert jnp.allclose(out, ref, atol=1e-4, rtol=1e-4), (
        f"mismatch vs reference, max abs err = {jnp.max(jnp.abs(out - ref))}")

    # Check 2: exercise the multi-block lane path with a masked tail
    # (hw = 460, lane_tile = 256 -> 2 lane blocks, tail of 204 lanes).
    H2, W2 = 20, 23
    x_t = jax.random.normal(kx2, (N, C, H2, W2), dtype=jnp.float32)
    out_t = jax.block_until_ready(
        bn_prelu(x_t, gamma, beta, alpha, max_lane_tile=256))
    ref_t = bn_prelu_reference(x_t, gamma, beta, alpha)
    assert jnp.allclose(out_t, ref_t, atol=1e-4, rtol=1e-4), (
        f"tail-path mismatch, max abs err = {jnp.max(jnp.abs(out_t - ref_t))}")

    print("KERNEL_OK")
</pallas_src>

<mosaic_0001>
module attributes {stable_mosaic.version = 11 : i64} {
  func.func @kernel(%arg0: i32, %arg1: i32, %arg2: memref<8x256xf32, #tpu.memory_space<vmem>>, %arg3: memref<8x2xf32, #tpu.memory_space<vmem>>) attributes {dimension_semantics = [#tpu.dimension_semantics<parallel>, #tpu.dimension_semantics<arbitrary>], iteration_bounds = array<i64: 1, 1>, scalar_prefetch = 0 : i64, scratch_operands = 0 : i64, tpu.core_type = #tpu.core_type<tc>, window_params = [{transform_indices = @transform_0, window_bounds = array<i64: 8, 256>}, {transform_indices = @transform_1, window_bounds = array<i64: 8, 2>}]} {
    %c0 = arith.constant 0 : index
    %c0_0 = arith.constant 0 : index
    %0 = vector.load %arg2[%c0, %c0_0] : memref<8x256xf32, #tpu.memory_space<vmem>>, vector<8x256xf32>
    %cst = arith.constant dense<0.000000e+00> : vector<8xf32>
    %1 = vector.multi_reduction <add>, %0, %cst [1] : vector<8x256xf32> to vector<8xf32>
    %2 = vector.shape_cast %1 : vector<8xf32> to vector<8x1xf32>
    %c0_1 = arith.constant 0 : index
    %c0_2 = arith.constant 0 : index
    %3 = vector.load %arg3[%c0_1, %c0_2] : memref<8x2xf32, #tpu.memory_space<vmem>>, vector<8x1xf32>
    tpu.vector_store %arg3[%c0_1, %c0_2], %2 {strides = array<i32>} : memref<8x2xf32, #tpu.memory_space<vmem>>, vector<8x1xf32>,
    %4 = arith.mulf %0, %0 : vector<8x256xf32>
    %cst_3 = arith.constant dense<0.000000e+00> : vector<8xf32>
    %5 = vector.multi_reduction <add>, %4, %cst_3 [1] : vector<8x256xf32> to vector<8xf32>
    %6 = vector.shape_cast %5 : vector<8xf32> to vector<8x1xf32>
    %c0_4 = arith.constant 0 : index
    %c1 = arith.constant 1 : index
    %7 = vector.load %arg3[%c0_4, %c1] : memref<8x2xf32, #tpu.memory_space<vmem>>, vector<8x1xf32>
    tpu.vector_store %arg3[%c0_4, %c1], %6 {strides = array<i32>} : memref<8x2xf32, #tpu.memory_space<vmem>>, vector<8x1xf32>,
    return
  }
  func.func @transform_0(%arg0: i32, %arg1: i32) -> (i32, i32) {
    %c0_i32 = arith.constant 0 : i32
    return %arg0, %arg1 : i32, i32
  }
  func.func @transform_1(%arg0: i32, %arg1: i32) -> (i32, i32) {
    %c0_i32 = arith.constant 0 : i32
    %c0_i32_0 = arith.constant 0 : i32
    return %arg0, %c0_i32 : i32, i32
  }
}

</mosaic_0001>

<llo_original>
// kernel: tpu_custom_call.1
$region0: #{tpu_custom_call.1}
  #allocation0 [shape = 'u32[]', space=smem, size = 0x4, offset = 0x4, fixed_abs, tag = 'smem constant byte address 0x4 - core index']
  #allocation1 [shape = 'u32[72,128]{1,0:T(1,128)}', space=vmem, size = 0x9000, scoped, tag = 'internal scratch']
  %s0 = inlined_call_operand.hbm [shape: f32[8,256], index: 0, kind: input, shape index: {}]
  %s1 = inlined_call_operand.vmem [shape: f32[8,2], index: 1, kind: output, shape index: {}]
  %s2 = sld [smem:[#allocation0]]
  $region18: #{tpu_custom_call.1} parent=0
    _
  %s4 = ssub.s32 1, %s2
  %s5 = scalar_select 0, %s4, %s2
  $region1: #{tpu_custom_call.1} parent=0
    #allocation2 [shape = 'u8[8192]{0}', space=vmem, size = 0x2000, scoped, tag = 'input window, operand 0, single buffered']
    #allocation3 [shape = 's32[1]{0}', space=sflag, size = 0x4, scoped, tag = 'scoped memory for tpu_custom_call.1']
    %6 = vsyncpa [#allocation3], 0
    // Predicated region
    $region2: #{tpu_custom_call.1} parent=1 // pred_check
      _
    $region3: #{tpu_custom_call.1} parent=1 // pred_check_branch
      %8 = sbr.rel (0) target = $region5
    $region4: #{tpu_custom_call.1} parent=1 // pred_region
      %10 = vsyncadd [#allocation3], 0
      %s12 = sshll.u32 %s0, 4
      %s13 = int_to_ptr.hbm [resolvable:$true] %s12
      %s14 = sshll.u32 [#allocation2], 4
      %s15 = int_to_ptr.vmem [resolvable:$true] %s14
      %17 = dma.hbm_to_vmem [thread:$0]  %s13, 256, %s15, [#allocation3]
    $region5: #{tpu_custom_call.1} parent=1 // pred_fallthru
      _
    // Predicated region
    $region6: #{tpu_custom_call.1} parent=1 // pred_check
      _
    $region7: #{tpu_custom_call.1} parent=1 // pred_check_branch
      %19 = sbr.rel (0) target = $region9
    $region8: #{tpu_custom_call.1} parent=1 // pred_region
      %21 = dma.done [#allocation3], 256
    $region9: #{tpu_custom_call.1} parent=1 // pred_fallthru
      _
    %v22 = vld [vmem:[#allocation2] sm:$0xff]
    %v23 = vld [vmem:[#allocation2 + $0x8] sm:$0xff]
    %v24 = vadd.f32 %v22, %v23
    %25 = vadd.xlane.f32.xlu0 %v24
    %v26 = vpop.xlane.xlu0 %25
    %vm27 = vcmask 7168
    %28 = vst.msk [vmem:[%s1] sm:$0xff] %vm27, %v26
    %v29 = vmul.f32 %v22, %v22
    %v30 = vmul.f32 %v23, %v23
    %v31 = vadd.f32 %v29, %v30
    %32 = vadd.xlane.f32.xlu0 %v31
    %v33 = vpop.xlane.xlu0 %32
    %vm34 = vcmask 15368
    %35 = vst.msk [vmem:[%s1] sm:$0xff] %vm34, %v33
    // Predicated region
    $region10: #{tpu_custom_call.1} parent=1 // pred_check
      _
    $region11: #{tpu_custom_call.1} parent=1 // pred_check_branch
      %37 = sbr.rel (0) target = $region13
    $region12: #{tpu_custom_call.1} parent=1 // pred_region
      _
    $region13: #{tpu_custom_call.1} parent=1 // pred_fallthru
      _
    // Predicated region
    $region14: #{tpu_custom_call.1} parent=1 // pred_check
      _
    $region15: #{tpu_custom_call.1} parent=1 // pred_check_branch
      %39 = sbr.rel (0) target = $region17
    $region16: #{tpu_custom_call.1} parent=1 // pred_region
      _
    $region17: #{tpu_custom_call.1} parent=1 // pred_fallthru
      _
    %40 = vsyncpa [#allocation3], 1

</llo_original>
